<compile_context>
chip_gen: v7x
topology: tpu7x:2x2x1
jax: 0.10.0
libtpu: 0.0.40
codegen_flags: <defaults>
</compile_context>

<pallas_src>
import jax
import jax.numpy as jnp
from jax.experimental import pallas as pl
from jax.experimental.pallas import tpu as pltpu


def cnet_kernel(x_ref, w1_ref, b1_ref, w2_ref, b2_ref, w3_ref, b3_ref, o_ref):
    # Layer 1: relu(x @ W1 + b1). Cast the activation to the MXU compute dtype
    # in-kernel (x stays f32 in HBM); accumulate and do the epilogue in f32.
    x = x_ref[...].astype(w1_ref.dtype)
    h1 = jnp.dot(x, w1_ref[...], preferred_element_type=jnp.float32)
    h1 = jnp.maximum(h1 + b1_ref[...], 0.0)
    # Layer 2: relu(h1 @ W2 + b2).
    h1 = h1.astype(w2_ref.dtype)
    h2 = jnp.dot(h1, w2_ref[...], preferred_element_type=jnp.float32)
    h2 = jnp.maximum(h2 + b2_ref[...], 0.0)
    # Layer 3: h2 @ W3 + b3 (no activation).
    h2 = h2.astype(w3_ref.dtype)
    out = jnp.dot(h2, w3_ref[...], preferred_element_type=jnp.float32)
    o_ref[...] = (out + b3_ref[...]).astype(o_ref.dtype)


def _round_up(v, m):
    return (v + m - 1) // m * m


def prepare_cnet_params(params, compute_dtype=jnp.bfloat16):
    """One-time weight cast (per review: don't recast on every forward).

    W is (in_features, out_features) (transposed vs. PyTorch), b is (1, out).
    Weights go to the MXU compute dtype; biases stay f32 for the f32 epilogue.
    """
    return {
        "W1": params["W1"].astype(compute_dtype),
        "W2": params["W2"].astype(compute_dtype),
        "W3": params["W3"].astype(compute_dtype),
        "b1": params["b1"].astype(jnp.float32),
        "b2": params["b2"].astype(jnp.float32),
        "b3": params["b3"].astype(jnp.float32),
    }


def cnet_forward(x, prepared, *, block_b=1024):
    """x: (B, n_feature) f32. prepared: output of prepare_cnet_params."""
    w1, b1 = prepared["W1"], prepared["b1"]
    w2, b2 = prepared["W2"], prepared["b2"]
    w3, b3 = prepared["W3"], prepared["b3"]

    B, n_feature = x.shape
    n_h1 = w1.shape[1]
    n_h2 = w2.shape[1]
    n_out = w3.shape[1]

    SUB = 8  # f32 sublane multiple (x and out tiles are f32 in VMEM).
    # Keep >= 2 grid steps when B allows so dimension_semantics=("parallel",)
    # actually splits the batch across both TensorCores on v7x; cap at block_b.
    half = _round_up(max(pl.cdiv(B, 2), 1), SUB)
    tb = max(SUB, min(_round_up(block_b, SUB), half))
    b_pad = _round_up(B, tb)
    grid = (b_pad // tb,)

    # Only batch rows (if any) are padded; lane dims stay native.
    x_p = x if b_pad == B else jnp.pad(x, ((0, b_pad - B), (0, 0)))

    w_itemsize = jnp.dtype(w1.dtype).itemsize
    flops = 2 * b_pad * (n_feature * n_h1 + n_h1 * n_h2 + n_h2 * n_out)
    bytes_accessed = (
        b_pad * n_feature * jnp.dtype(x.dtype).itemsize      # x read
        + b_pad * n_out * 4                                   # out write (f32)
        + (w1.size + w2.size + w3.size) * w_itemsize          # weights
        + (b1.size + b2.size + b3.size) * 4                   # biases
    )

    out_p = pl.pallas_call(
        cnet_kernel,
        out_shape=jax.ShapeDtypeStruct((b_pad, n_out), jnp.float32),
        grid=grid,
        in_specs=[
            pl.BlockSpec((tb, n_feature), lambda i: (i, 0)),    # x: batch-tiled, unpadded lanes
            pl.BlockSpec((n_feature, n_h1), lambda i: (0, 0)),  # W1: VMEM-resident
            pl.BlockSpec((1, n_h1), lambda i: (0, 0)),          # b1
            pl.BlockSpec((n_h1, n_h2), lambda i: (0, 0)),       # W2
            pl.BlockSpec((1, n_h2), lambda i: (0, 0)),          # b2
            pl.BlockSpec((n_h2, n_out), lambda i: (0, 0)),      # W3
            pl.BlockSpec((1, n_out), lambda i: (0, 0)),         # b3
        ],
        out_specs=pl.BlockSpec((tb, n_out), lambda i: (i, 0)),
        compiler_params=pltpu.CompilerParams(
            dimension_semantics=("parallel",),
        ),
        cost_estimate=pl.CostEstimate(
            flops=flops, transcendentals=0, bytes_accessed=bytes_accessed
        ),
    )(x_p, w1, b1, w2, b2, w3, b3)

    # Only the padded batch rows (if any) need slicing off; lanes are native.
    return out_p[:B] if b_pad != B else out_p


def init_cnet_params(key, n_feature, n_hidden, n_hidden2, n_output):
    """Deterministic init mimicking torch.nn.Linear's U(-1/sqrt(fan_in), 1/sqrt(fan_in))."""
    ks = jax.random.split(key, 6)

    def linear(kw, kb, fan_in, fan_out):
        bound = 1.0 / jnp.sqrt(jnp.float32(fan_in))
        w = jax.random.uniform(kw, (fan_in, fan_out), jnp.float32, -bound, bound)
        b = jax.random.uniform(kb, (1, fan_out), jnp.float32, -bound, bound)
        return w, b

    w1, b1 = linear(ks[0], ks[1], n_feature, n_hidden)
    w2, b2 = linear(ks[2], ks[3], n_hidden, n_hidden2)
    w3, b3 = linear(ks[4], ks[5], n_hidden2, n_output)
    return {"W1": w1, "b1": b1, "W2": w2, "b2": b2, "W3": w3, "b3": b3}


if __name__ == "__main__":
    # Shapes consistent with the module's forward: x is (batch, n_feature).
    # B=256 with block_b=1024 -> tb=128, a 2-step batch grid (pipelined, and
    # both TensorCores participate on v7x).
    B, n_feature, n_hidden, n_hidden2, n_output = 256, 32, 64, 64, 16

    key = jax.random.PRNGKey(0)
    kx, kp = jax.random.split(key)
    x = jax.random.normal(kx, (B, n_feature), jnp.float32)
    params = init_cnet_params(kp, n_feature, n_hidden, n_hidden2, n_output)

    # Pure-JAX reference of the same forward pass.
    h = jnp.maximum(x @ params["W1"] + params["b1"], 0.0)
    h = jnp.maximum(h @ params["W2"] + params["b2"], 0.0)
    ref = h @ params["W3"] + params["b3"]

    # f32 MXU-input path: tight tolerance.
    prep_f32 = prepare_cnet_params(params, compute_dtype=jnp.float32)
    out_f32 = jax.block_until_ready(cnet_forward(x, prep_f32))
    assert out_f32.shape == (B, n_output)
    assert jnp.allclose(out_f32, ref, atol=1e-5, rtol=1e-5)

    # bf16 MXU-input default path (v6e/v7x-oriented): relaxed tolerance,
    # f32 accumulate + f32 bias/ReLU epilogue.
    prep_bf16 = prepare_cnet_params(params, compute_dtype=jnp.bfloat16)
    out_bf16 = jax.block_until_ready(cnet_forward(x, prep_bf16))
    assert out_bf16.shape == (B, n_output)
    assert jnp.allclose(out_bf16, ref, atol=5e-2, rtol=5e-2)

    print("KERNEL_OK")
</pallas_src>

<mosaic_0001>
module attributes {stable_mosaic.version = 11 : i64} {
  func.func @cnet_kernel(%arg0: i32, %arg1: memref<128x32xf32, #tpu.memory_space<vmem>>, %arg2: memref<32x64xf32, #tpu.memory_space<vmem>>, %arg3: memref<1x64xf32, #tpu.memory_space<vmem>>, %arg4: memref<64x64xf32, #tpu.memory_space<vmem>>, %arg5: memref<1x64xf32, #tpu.memory_space<vmem>>, %arg6: memref<64x16xf32, #tpu.memory_space<vmem>>, %arg7: memref<1x16xf32, #tpu.memory_space<vmem>>, %arg8: memref<128x16xf32, #tpu.memory_space<vmem>>) attributes {dimension_semantics = [#tpu.dimension_semantics<parallel>], iteration_bounds = array<i64: 2>, scalar_prefetch = 0 : i64, scratch_operands = 0 : i64, tpu.core_type = #tpu.core_type<tc>, window_params = [{transform_indices = @transform_0, window_bounds = array<i64: 128, 32>}, {pipeline_mode = #tpu.pipeline_mode<synchronous>, transform_indices = @transform_1, window_bounds = array<i64: 32, 64>}, {pipeline_mode = #tpu.pipeline_mode<synchronous>, transform_indices = @transform_2, window_bounds = array<i64: 1, 64>}, {pipeline_mode = #tpu.pipeline_mode<synchronous>, transform_indices = @transform_3, window_bounds = array<i64: 64, 64>}, {pipeline_mode = #tpu.pipeline_mode<synchronous>, transform_indices = @transform_4, window_bounds = array<i64: 1, 64>}, {pipeline_mode = #tpu.pipeline_mode<synchronous>, transform_indices = @transform_5, window_bounds = array<i64: 64, 16>}, {pipeline_mode = #tpu.pipeline_mode<synchronous>, transform_indices = @transform_6, window_bounds = array<i64: 1, 16>}, {transform_indices = @transform_7, window_bounds = array<i64: 128, 16>}]} {
    %c0 = arith.constant 0 : index
    %c0_0 = arith.constant 0 : index
    %0 = vector.load %arg1[%c0, %c0_0] : memref<128x32xf32, #tpu.memory_space<vmem>>, vector<128x32xf32>
    %c0_1 = arith.constant 0 : index
    %c0_2 = arith.constant 0 : index
    %1 = vector.load %arg2[%c0_1, %c0_2] : memref<32x64xf32, #tpu.memory_space<vmem>>, vector<32x64xf32>
    %cst = arith.constant dense<0.000000e+00> : vector<128x64xf32>
    %2 = tpu.matmul %0, %1, %cst {dimension_numbers = #tpu.dot_dimension_numbers<[1], [0], [0], [1], [0, 0, 1, 1], [], []>} : vector<128x32xf32>, vector<32x64xf32>, vector<128x64xf32> -> vector<128x64xf32>
    %c0_3 = arith.constant 0 : index
    %c0_4 = arith.constant 0 : index
    %3 = vector.load %arg3[%c0_3, %c0_4] : memref<1x64xf32, #tpu.memory_space<vmem>>, vector<1x64xf32>
    %4 = vector.broadcast %3 : vector<1x64xf32> to vector<128x64xf32>
    %5 = arith.addf %2, %4 : vector<128x64xf32>
    %cst_5 = arith.constant 0.000000e+00 : f32
    %6 = vector.broadcast %cst_5 : f32 to vector<128x64xf32>
    %7 = arith.maximumf %5, %6 : vector<128x64xf32>
    %c0_6 = arith.constant 0 : index
    %c0_7 = arith.constant 0 : index
    %8 = vector.load %arg4[%c0_6, %c0_7] : memref<64x64xf32, #tpu.memory_space<vmem>>, vector<64x64xf32>
    %cst_8 = arith.constant dense<0.000000e+00> : vector<128x64xf32>
    %9 = tpu.matmul %7, %8, %cst_8 {dimension_numbers = #tpu.dot_dimension_numbers<[1], [0], [0], [1], [0, 0, 1, 1], [], []>} : vector<128x64xf32>, vector<64x64xf32>, vector<128x64xf32> -> vector<128x64xf32>
    %c0_9 = arith.constant 0 : index
    %c0_10 = arith.constant 0 : index
    %10 = vector.load %arg5[%c0_9, %c0_10] : memref<1x64xf32, #tpu.memory_space<vmem>>, vector<1x64xf32>
    %11 = vector.broadcast %10 : vector<1x64xf32> to vector<128x64xf32>
    %12 = arith.addf %9, %11 : vector<128x64xf32>
    %cst_11 = arith.constant 0.000000e+00 : f32
    %13 = vector.broadcast %cst_11 : f32 to vector<128x64xf32>
    %14 = arith.maximumf %12, %13 : vector<128x64xf32>
    %c0_12 = arith.constant 0 : index
    %c0_13 = arith.constant 0 : index
    %15 = vector.load %arg6[%c0_12, %c0_13] : memref<64x16xf32, #tpu.memory_space<vmem>>, vector<64x16xf32>
    %cst_14 = arith.constant dense<0.000000e+00> : vector<128x16xf32>
    %16 = tpu.matmul %14, %15, %cst_14 {dimension_numbers = #tpu.dot_dimension_numbers<[1], [0], [0], [1], [0, 0, 1, 1], [], []>} : vector<128x64xf32>, vector<64x16xf32>, vector<128x16xf32> -> vector<128x16xf32>
    %c0_15 = arith.constant 0 : index
    %c0_16 = arith.constant 0 : index
    %17 = vector.load %arg7[%c0_15, %c0_16] : memref<1x16xf32, #tpu.memory_space<vmem>>, vector<1x16xf32>
    %18 = vector.broadcast %17 : vector<1x16xf32> to vector<128x16xf32>
    %19 = arith.addf %16, %18 : vector<128x16xf32>
    %c0_17 = arith.constant 0 : index
    %c0_18 = arith.constant 0 : index
    %20 = vector.load %arg8[%c0_17, %c0_18] : memref<128x16xf32, #tpu.memory_space<vmem>>, vector<128x16xf32>
    tpu.vector_store %arg8[%c0_17, %c0_18], %19 {strides = array<i32>} : memref<128x16xf32, #tpu.memory_space<vmem>>, vector<128x16xf32>,
    return
  }
  func.func @transform_0(%arg0: i32) -> (i32, i32) {
    %c0_i32 = arith.constant 0 : i32
    %c0_i32_0 = arith.constant 0 : i32
    return %arg0, %c0_i32 : i32, i32
  }
  func.func @transform_1(%arg0: i32) -> (i32, i32) {
    %c0_i32 = arith.constant 0 : i32
    %c0_i32_0 = arith.constant 0 : i32
    %c0_i32_1 = arith.constant 0 : i32
    return %c0_i32, %c0_i32_0 : i32, i32
  }
  func.func @transform_2(%arg0: i32) -> (i32, i32) {
    %c0_i32 = arith.constant 0 : i32
    %c0_i32_0 = arith.constant 0 : i32
    %c0_i32_1 = arith.constant 0 : i32
    return %c0_i32, %c0_i32_0 : i32, i32
  }
  func.func @transform_3(%arg0: i32) -> (i32, i32) {
    %c0_i32 = arith.constant 0 : i32
    %c0_i32_0 = arith.constant 0 : i32
    %c0_i32_1 = arith.constant 0 : i32
    return %c0_i32, %c0_i32_0 : i32, i32
  }
  func.func @transform_4(%arg0: i32) -> (i32, i32) {
    %c0_i32 = arith.constant 0 : i32
    %c0_i32_0 = arith.constant 0 : i32
    %c0_i32_1 = arith.constant 0 : i32
    return %c0_i32, %c0_i32_0 : i32, i32
  }
  func.func @transform_5(%arg0: i32) -> (i32, i32) {
    %c0_i32 = arith.constant 0 : i32
    %c0_i32_0 = arith.constant 0 : i32
    %c0_i32_1 = arith.constant 0 : i32
    return %c0_i32, %c0_i32_0 : i32, i32
  }
  func.func @transform_6(%arg0: i32) -> (i32, i32) {
    %c0_i32 = arith.constant 0 : i32
    %c0_i32_0 = arith.constant 0 : i32
    %c0_i32_1 = arith.constant 0 : i32
    return %c0_i32, %c0_i32_0 : i32, i32
  }
  func.func @transform_7(%arg0: i32) -> (i32, i32) {
    %c0_i32 = arith.constant 0 : i32
    %c0_i32_0 = arith.constant 0 : i32
    return %arg0, %c0_i32 : i32, i32
  }
}

</mosaic_0001>

<llo_original>
// kernel: tpu_custom_call.1
$region0: #{tpu_custom_call.1}
  #allocation0 [shape = 'u32[]', space=smem, size = 0x4, offset = 0x4, fixed_abs, tag = 'smem constant byte address 0x4 - core index']
  #allocation1 [shape = 'u32[144,128]{1,0:T(1,128)}', space=vmem, size = 0x12000, scoped, tag = 'internal scratch']
  %s0 = inlined_call_operand.vmem [shape: f32[256,32], index: 0, kind: input, shape index: {}]
  %s1 = inlined_call_operand.vmem [shape: f32[32,64], index: 1, kind: input, shape index: {}]
  %s2 = inlined_call_operand.vmem [shape: f32[1,64], index: 2, kind: input, shape index: {}]
  %s3 = inlined_call_operand.vmem [shape: f32[64,64], index: 3, kind: input, shape index: {}]
  %s4 = inlined_call_operand.vmem [shape: f32[1,64], index: 4, kind: input, shape index: {}]
  %s5 = inlined_call_operand.vmem [shape: f32[64,16], index: 5, kind: input, shape index: {}]
  %s6 = inlined_call_operand.vmem [shape: f32[1,16], index: 6, kind: input, shape index: {}]
  %s7 = inlined_call_operand.vmem [shape: f32[256,16], index: 7, kind: output, shape index: {}]
  %s8 = sld [smem:[#allocation0]]
  $region61: #{tpu_custom_call.1} parent=0
    _
  %s10 = ssub.s32 1, %s8
  %s11 = scalar_select 0, %s10, %s8
  loop: start=0, step=1, limit=4
  $region2: #{tpu_custom_call.1} parent=0 // loop_pre_header
    _
  $region3: #{tpu_custom_call.1} parent=0 // loop_header
    %s13 = sphi 0, %s17
    %p14 = scmp.ge.s32.totalorder %s13, 4
    %s23 = sphi 0, %s25
    %s26 = sphi 0, %s23
    %s27 = sphi 0, %s26
    %s43 = sphi 0, %s27
    %s47 = sphi 0, %s47
    %s49 = sphi 0, %s47
    %s50 = sphi 0, %s49
    %s64 = sphi 0, %s50
    %s68 = sphi 0, %s68
    %s70 = sphi 0, %s68
    %s71 = sphi 0, %s70
    %s85 = sphi 0, %s71
    %s89 = sphi 0, %s89
    %s91 = sphi 0, %s89
    %s92 = sphi 0, %s91
    %s106 = sphi 0, %s92
    %s110 = sphi 0, %s110
    %s112 = sphi 0, %s110
    %s113 = sphi 0, %s112
    %s127 = sphi 0, %s113
    %s131 = sphi 0, %s131
    %s133 = sphi 0, %s131
    %s134 = sphi 0, %s133
    %s148 = sphi 0, %s134
    %s152 = sphi 0, %s152
    %s154 = sphi 0, %s152
    %s155 = sphi 0, %s154
    %s169 = sphi 0, %s155
    %s175 = sphi 0, %s177
    %s178 = sphi 0, %s175
    %s179 = sphi 0, %s178
    %s195 = sphi 0, %s179
  $region4: #{tpu_custom_call.1} parent=0 // loop_header_branch
    %16 = sbr.rel (%p14) target = $region8
  $region5: #{tpu_custom_call.1} parent=0 // loop_body
    %s18 = ssub.s32 %s13, 1
    %s19 = ssub.s32 %s13, 2
    %s20 = sadd.s32 %s13, 1
    %s21 = ssub.s32 %s13, %s20
    %p22 = scmp.eq.s32.totalorder %s21, 0
    %s24 = sadd.s32 %s23, 1
    %s25 = scalar_select %p22, %s23, %s24
    %p28 = pneg %p22
    %p29 = scmp.eq.s32.totalorder %s13, 1
    %p30 = por %p28, %p29
    %p31 = scmp.ne.s32.totalorder %s23, %s26
    %p32 = scmp.eq.s32.totalorder %s13, 0
    %p33 = por %p31, %p32
    %p34 = scmp.ne.s32.totalorder %s23, %s26
    %p35 = scmp.eq.s32.totalorder %s18, 1
    %p36 = por %p34, %p35
    %p37 = scmp.ne.s32.totalorder %s26, %s27
    %p38 = scmp.eq.s32.totalorder %s18, 0
    %p39 = por %p37, %p38
    %p40 = scmp.ne.s32.totalorder %s26, %s27
    %p41 = scmp.eq.s32.totalorder %s19, 1
    %p42 = por %p40, %p41
    %p44 = scmp.ne.s32.totalorder %s27, %s43
    %p45 = scmp.eq.s32.totalorder %s19, 0
    %p46 = por %p44, %p45
    %s48 = sadd.s32 %s47, 1
    %p51 = scmp.eq.s32.totalorder %s13, 1
    %p52 = scmp.ne.s32.totalorder %s47, %s49
    %p53 = scmp.eq.s32.totalorder %s13, 0
    %p54 = por %p52, %p53
    %p55 = scmp.ne.s32.totalorder %s47, %s49
    %p56 = scmp.eq.s32.totalorder %s18, 1
    %p57 = por %p55, %p56
    %p58 = scmp.ne.s32.totalorder %s49, %s50
    %p59 = scmp.eq.s32.totalorder %s18, 0
    %p60 = por %p58, %p59
    %p61 = scmp.ne.s32.totalorder %s49, %s50
    %p62 = scmp.eq.s32.totalorder %s19, 1
    %p63 = por %p61, %p62
    %p65 = scmp.ne.s32.totalorder %s50, %s64
    %p66 = scmp.eq.s32.totalorder %s19, 0
    %p67 = por %p65, %p66
    %s69 = sadd.s32 %s68, 1
    %p72 = scmp.eq.s32.totalorder %s13, 1
    %p73 = scmp.ne.s32.totalorder %s68, %s70
    %p74 = scmp.eq.s32.totalorder %s13, 0
    %p75 = por %p73, %p74
    %p76 = scmp.ne.s32.totalorder %s68, %s70
    %p77 = scmp.eq.s32.totalorder %s18, 1
    %p78 = por %p76, %p77
    %p79 = scmp.ne.s32.totalorder %s70, %s71
    %p80 = scmp.eq.s32.totalorder %s18, 0
    %p81 = por %p79, %p80
    %p82 = scmp.ne.s32.totalorder %s70, %s71
    %p83 = scmp.eq.s32.totalorder %s19, 1
    %p84 = por %p82, %p83
    %p86 = scmp.ne.s32.totalorder %s71, %s85
    %p87 = scmp.eq.s32.totalorder %s19, 0
    %p88 = por %p86, %p87
    %s90 = sadd.s32 %s89, 1
    %p93 = scmp.eq.s32.totalorder %s13, 1
    %p94 = scmp.ne.s32.totalorder %s89, %s91
    %p95 = scmp.eq.s32.totalorder %s13, 0
    %p96 = por %p94, %p95
    %p97 = scmp.ne.s32.totalorder %s89, %s91
    %p98 = scmp.eq.s32.totalorder %s18, 1
    %p99 = por %p97, %p98
    %p100 = scmp.ne.s32.totalorder %s91, %s92
    %p101 = scmp.eq.s32.totalorder %s18, 0
    %p102 = por %p100, %p101
    %p103 = scmp.ne.s32.totalorder %s91, %s92
    %p104 = scmp.eq.s32.totalorder %s19, 1
    %p105 = por %p103, %p104
    %p107 = scmp.ne.s32.totalorder %s92, %s106
    %p108 = scmp.eq.s32.totalorder %s19, 0
    %p109 = por %p107, %p108
    %s111 = sadd.s32 %s110, 1
    %p114 = scmp.eq.s32.totalorder %s13, 1
    %p115 = scmp.ne.s32.totalorder %s110, %s112
    %p116 = scmp.eq.s32.totalorder %s13, 0
    %p117 = por %p115, %p116
    %p118 = scmp.ne.s32.totalorder %s110, %s112
    %p119 = scmp.eq.s32.totalorder %s18, 1
    %p120 = por %p118, %p119
    %p121 = scmp.ne.s32.totalorder %s112, %s113
    %p122 = scmp.eq.s32.totalorder %s18, 0
    %p123 = por %p121, %p122
    %p124 = scmp.ne.s32.totalorder %s112, %s113
    %p125 = scmp.eq.s32.totalorder %s19, 1
    %p126 = por %p124, %p125
    %p128 = scmp.ne.s32.totalorder %s113, %s127
    %p129 = scmp.eq.s32.totalorder %s19, 0
    %p130 = por %p128, %p129
    %s132 = sadd.s32 %s131, 1
    %p135 = scmp.eq.s32.totalorder %s13, 1
    %p136 = scmp.ne.s32.totalorder %s131, %s133
    %p137 = scmp.eq.s32.totalorder %s13, 0
    %p138 = por %p136, %p137
    %p139 = scmp.ne.s32.totalorder %s131, %s133
    %p140 = scmp.eq.s32.totalorder %s18, 1
    %p141 = por %p139, %p140
    %p142 = scmp.ne.s32.totalorder %s133, %s134
    %p143 = scmp.eq.s32.totalorder %s18, 0
    %p144 = por %p142, %p143
    %p145 = scmp.ne.s32.totalorder %s133, %s134
    %p146 = scmp.eq.s32.totalorder %s19, 1
    %p147 = por %p145, %p146
    %p149 = scmp.ne.s32.totalorder %s134, %s148
    %p150 = scmp.eq.s32.totalorder %s19, 0
    %p151 = por %p149, %p150
    %s153 = sadd.s32 %s152, 1
    %p156 = scmp.eq.s32.totalorder %s13, 1
    %p157 = scmp.ne.s32.totalorder %s152, %s154
    %p158 = scmp.eq.s32.totalorder %s13, 0
    %p159 = por %p157, %p158
    %p160 = scmp.ne.s32.totalorder %s152, %s154
    %p161 = scmp.eq.s32.totalorder %s18, 1
    %p162 = por %p160, %p161
    %p163 = scmp.ne.s32.totalorder %s154, %s155
    %p164 = scmp.eq.s32.totalorder %s18, 0
    %p165 = por %p163, %p164
    %p166 = scmp.ne.s32.totalorder %s154, %s155
    %p167 = scmp.eq.s32.totalorder %s19, 1
    %p168 = por %p166, %p167
    %p170 = scmp.ne.s32.totalorder %s155, %s169
    %p171 = scmp.eq.s32.totalorder %s19, 0
    %p172 = por %p170, %p171
    %s173 = ssub.s32 %s13, %s20
    %p174 = scmp.eq.s32.totalorder %s173, 0
    %s176 = sadd.s32 %s175, 1
    %s177 = scalar_select %p174, %s175, %s176
    %p180 = pneg %p174
    %p181 = scmp.eq.s32.totalorder %s13, 1
    %p182 = por %p180, %p181
    %p183 = scmp.ne.s32.totalorder %s175, %s178
    %p184 = scmp.eq.s32.totalorder %s13, 0
    %p185 = por %p183, %p184
    %p186 = scmp.ne.s32.totalorder %s175, %s178
    %p187 = scmp.eq.s32.totalorder %s18, 1
    %p188 = por %p186, %p187
    %p189 = scmp.ne.s32.totalorder %s178, %s179
    %p190 = scmp.eq.s32.totalorder %s18, 0
    %p191 = por %p189, %p190
    %p192 = scmp.ne.s32.totalorder %s178, %s179
    %p193 = scmp.eq.s32.totalorder %s19, 1
    %p194 = por %p192, %p193
    %p196 = scmp.ne.s32.totalorder %s179, %s195
    %p197 = scmp.eq.s32.totalorder %s19, 0
    %p198 = por %p196, %p197
    %p199 = scmp.le.s32.totalorder 1, %s13
    %p200 = scmp.lt.s32.totalorder %s13, 3
    %p201 = pnand %p199, %p200
    %p202 = pneg %p201
    // Predicated region
    $region9: #{tpu_custom_call.1} parent=5 // pred_check
      _
    $region10: #{tpu_custom_call.1} parent=5 // pred_check_branch
      %204 = sbr.rel (%p201) target = $region12
    $region11: #{tpu_custom_call.1} parent=5 // pred_region
      %s205 = ssub.s32 %s13, 1
      // Predicated region
      $region13: #{tpu_custom_call.1} parent=11 // pred_check
        %p206 = pneg %p60
      $region14: #{tpu_custom_call.1} parent=11 // pred_check_branch
        %208 = sbr.rel (%p206) target = $region16
      $region15: #{tpu_custom_call.1} parent=11 // pred_region
        _
      $region16: #{tpu_custom_call.1} parent=11 // pred_fallthru
        _
      // Predicated region
      $region17: #{tpu_custom_call.1} parent=11 // pred_check
        %p209 = pneg %p81
      $region18: #{tpu_custom_call.1} parent=11 // pred_check_branch
        %211 = sbr.rel (%p209) target = $region20
      $region19: #{tpu_custom_call.1} parent=11 // pred_region
        _
      $region20: #{tpu_custom_call.1} parent=11 // pred_fallthru
        _
      // Predicated region
      $region21: #{tpu_custom_call.1} parent=11 // pred_check
        %p212 = pneg %p102
      $region22: #{tpu_custom_call.1} parent=11 // pred_check_branch
        %214 = sbr.rel (%p212) target = $region24
      $region23: #{tpu_custom_call.1} parent=11 // pred_region
        _
      $region24: #{tpu_custom_call.1} parent=11 // pred_fallthru
        _
      // Predicated region
      $region25: #{tpu_custom_call.1} parent=11 // pred_check
        %p215 = pneg %p123
      $region26: #{tpu_custom_call.1} parent=11 // pred_check_branch
        %217 = sbr.rel (%p215) target = $region28
      $region27: #{tpu_custom_call.1} parent=11 // pred_region
        _
      $region28: #{tpu_custom_call.1} parent=11 // pred_fallthru
        _
      // Predicated region
      $region29: #{tpu_custom_call.1} parent=11 // pred_check
        %p218 = pneg %p144
      $region30: #{tpu_custom_call.1} parent=11 // pred_check_branch
        %220 = sbr.rel (%p218) target = $region32
      $region31: #{tpu_custom_call.1} parent=11 // pred_region
        _
      $region32: #{tpu_custom_call.1} parent=11 // pred_fallthru
        _
      // Predicated region
      $region33: #{tpu_custom_call.1} parent=11 // pred_check
        %p221 = pneg %p165
      $region34: #{tpu_custom_call.1} parent=11 // pred_check_branch
        %223 = sbr.rel (%p221) target = $region36
      $region35: #{tpu_custom_call.1} parent=11 // pred_region
        _
      $region36: #{tpu_custom_call.1} parent=11 // pred_fallthru
        _
    $region12: #{tpu_custom_call.1} parent=5 // pred_fallthru
      _
    %p224 = scmp.lt.s32.totalorder %s13, 2
    // Predicated region
    $region37: #{tpu_custom_call.1} parent=5 // pred_check
      %p225 = pneg %p224
    $region38: #{tpu_custom_call.1} parent=5 // pred_check_branch
      %227 = sbr.rel (%p225) target = $region40
    $region39: #{tpu_custom_call.1} parent=5 // pred_region
      // Predicated region
      $region41: #{tpu_custom_call.1} parent=39 // pred_check
        %p228 = pneg %p33
      $region42: #{tpu_custom_call.1} parent=39 // pred_check_branch
        %230 = sbr.rel (%p228) target = $region44
      $region43: #{tpu_custom_call.1} parent=39 // pred_region
        %s231 = smul.u32 16, %s13
        %p232 = scmp.lt.s32.totalorder %s231, 31
        %s233 = scalar_select %p232, %s231, 31
        %s234 = smul.addr %s233, 8
        %s235 = scalar_lea.vmem %s0, %s234
        %s236 = smul.u32 16, %s13
      $region44: #{tpu_custom_call.1} parent=39 // pred_fallthru
        _
    $region40: #{tpu_custom_call.1} parent=5 // pred_fallthru
      _
    %p237 = scmp.le.s32.totalorder 1, %s13
    %p238 = scmp.lt.s32.totalorder %s13, 3
    %p239 = pnand %p237, %p238
    %p240 = pneg %p239
    // Predicated region
    $region45: #{tpu_custom_call.1} parent=5 // pred_check
      _
    $region46: #{tpu_custom_call.1} parent=5 // pred_check_branch
      %242 = sbr.rel (%p239) target = $region48
    $region47: #{tpu_custom_call.1} parent=5 // pred_region
      %s243 = ssub.s32 %s13, 1
      %s244 = smul.u32 16, %s18
      %p245 = scmp.lt.s32.totalorder %s244, 31
      %s246 = scalar_select %p245, %s244, 31
      %s247 = smul.addr %s246, 8
      %s248 = scalar_lea.vmem %s0, %s247
      %p249 = pneg %p39
      %p250 = pneg %p36
      %p251 = pneg %p60
      %p252 = pneg %p57
      %p253 = pneg %p81
      %p254 = pneg %p78
      %p255 = pneg %p102
      %p256 = pneg %p99
      %p257 = pneg %p123
      %p258 = pneg %p120
      %p259 = pneg %p144
      %p260 = pneg %p141
      %p261 = pneg %p165
      %p262 = pneg %p162
      %p263 = pneg %p191
      %p264 = pneg %p188
      %s265 = smul.u32 16, %s18
      %p266 = scmp.lt.s32.totalorder %s265, 31
      %s267 = scalar_select %p266, %s265, 31
      %s268 = smul.addr %s267, 8
      %s269 = scalar_lea.vmem %s7, %s268
      %s270 = smul.u32 16, %s18
      %p271 = scmp.lt.s32.totalorder %s270, 31
      %s272 = scalar_select %p271, %s270, 31
      %s273 = smul.addr %s272, 8
      %s274 = scalar_lea.vmem %s0, %s273
      %s275 = smul.u32 16, %s18
      %s276 = smul.u32 16, %s18
      %p277 = scmp.lt.s32.totalorder %s276, 31
      %s278 = scalar_select %p277, %s276, 31
      %s279 = smul.addr %s278, 8
      %s280 = scalar_lea.vmem %s7, %s279
      %s281 = smul.u32 16, %s18
      %v282 = vld [vmem:[%s274] sm:$0xff]
      %v283 = vld [vmem:[%s274 + $0x8] sm:$0xff]
      %v284 = vld [vmem:[%s274 + $0x10] sm:$0xff]
      %v285 = vld [vmem:[%s274 + $0x18] sm:$0xff]
      %v286 = vld [vmem:[%s274 + $0x20] sm:$0xff]
      %v287 = vld [vmem:[%s274 + $0x28] sm:$0xff]
      %v288 = vld [vmem:[%s274 + $0x30] sm:$0xff]
      %v289 = vld [vmem:[%s274 + $0x38] sm:$0xff]
      %v290 = vld [vmem:[%s274 + $0x40] sm:$0xff]
      %v291 = vld [vmem:[%s274 + $0x48] sm:$0xff]
      %v292 = vld [vmem:[%s274 + $0x50] sm:$0xff]
      %v293 = vld [vmem:[%s274 + $0x58] sm:$0xff]
      %v294 = vld [vmem:[%s274 + $0x60] sm:$0xff]
      %v295 = vld [vmem:[%s274 + $0x68] sm:$0xff]
      %v296 = vld [vmem:[%s274 + $0x70] sm:$0xff]
      %v297 = vld [vmem:[%s274 + $0x78] sm:$0xff]
      %v298 = vld [vmem:[%s1] sm:$0xff]
      %v299 = vld [vmem:[%s1 + $0x8] sm:$0xff]
      %v300 = vld [vmem:[%s1 + $0x10] sm:$0xff]
      %v301 = vld [vmem:[%s1 + $0x18] sm:$0xff]
      %v302 = vld [vmem:[%s2] sm:$0x1]
      %v304 = vlaneseq
      %v305 = vshrl.u32 %v304, 7
      %v306 = vsub.s32 0, %v305
      %v307 = vrot.slane %v302, %v306
      %vm309 = vcmask 261120
      %v311 = vsel %vm309, %v282, 0
      %v314 = vsel %vm309, %v283, 0
      %v317 = vsel %vm309, %v284, 0
      %v320 = vsel %vm309, %v285, 0
      %v323 = vsel %vm309, %v286, 0
      %v326 = vsel %vm309, %v287, 0
      %v329 = vsel %vm309, %v288, 0
      %v332 = vsel %vm309, %v289, 0
      %v335 = vsel %vm309, %v290, 0
      %v338 = vsel %vm309, %v291, 0
      %v341 = vsel %vm309, %v292, 0
      %v344 = vsel %vm309, %v293, 0
      %v347 = vsel %vm309, %v294, 0
      %v350 = vsel %vm309, %v295, 0
      %v353 = vsel %vm309, %v296, 0
      %v356 = vsel %vm309, %v297, 0
      %358 = vmatprep.subr.mxu0 0.0
      %359 = vmatpush1.msra.mxu0 %v298
      %360 = vmatprep.subr.mxu0 0.0
      %361 = vmatpush1.msra.mxu0 %v299
      %362 = vmatprep.subr.mxu0 0.0
      %363 = vmatpush1.msra.mxu0 %v300
      %364 = vmatprep.subr.mxu0 0.0
      %365 = vmatpush1.msra.mxu0 %v301
      %366 = vmatprep.subr.mxu0 0.0
      %367 = vmatpush1.msra.mxu0 0.0
      %368 = vmatprep.subr.mxu0 0.0
      %369 = vmatpush1.msra.mxu0 0.0
      %370 = vmatprep.subr.mxu0 0.0
      %371 = vmatpush1.msra.mxu0 0.0
      %372 = vmatprep.subr.mxu0 0.0
      %373 = vmatpush1.msra.mxu0 0.0
      %374 = vmatprep.subr.mxu0 0.0
      %375 = vmatpush1.msra.mxu0 0.0
      %376 = vmatprep.subr.mxu0 0.0
      %377 = vmatpush1.msra.mxu0 0.0
      %378 = vmatprep.subr.mxu0 0.0
      %379 = vmatpush1.msra.mxu0 0.0
      %380 = vmatprep.subr.mxu0 0.0
      %381 = vmatpush1.msra.mxu0 0.0
      %382 = vmatprep.subr.mxu0 0.0
      %383 = vmatpush1.msra.mxu0 0.0
      %384 = vmatprep.subr.mxu0 0.0
      %385 = vmatpush1.msra.mxu0 0.0
      %386 = vmatprep.subr.mxu0 0.0
      %387 = vmatpush1.msra.mxu0 0.0
      %388 = vmatprep.subr.mxu0 0.0
      %389 = vmatpush1.msra.mxu0 0.0
      %390 = vmatprep.subr.mxu0 0.0
      %391 = vmatpush1.msra.mxu0 0.0
      %392 = vmatprep.subr.mxu0 0.0
      %393 = vmatpush1.msra.mxu0 0.0
      %394 = vmatprep.subr.mxu0 0.0
      %395 = vmatpush1.msra.mxu0 0.0
      %396 = vmatprep.subr.mxu0 0.0
      %397 = vmatpush1.msra.mxu0 0.0
      %398 = vmatprep.subr.mxu0 0.0
      %399 = vmatpush1.msra.mxu0 0.0
      %400 = vmatprep.subr.mxu0 0.0
      %401 = vmatpush1.msra.mxu0 0.0
      %402 = vmatprep.subr.mxu0 0.0
      %403 = vmatpush1.msra.mxu0 0.0
      %404 = vmatprep.subr.mxu0 0.0
      %405 = vmatpush1.msra.mxu0 0.0
      %406 = vmatprep.subr.mxu0 0.0
      %407 = vmatpush1.msra.mxu0 0.0
      %408 = vmatprep.subr.mxu0 0.0
      %409 = vmatpush1.msra.mxu0 0.0
      %410 = vmatprep.subr.mxu0 0.0
      %411 = vmatpush1.msra.mxu0 0.0
      %412 = vmatprep.subr.mxu0 0.0
      %413 = vmatpush1.msra.mxu0 0.0
      %414 = vmatprep.subr.mxu0 0.0
      %415 = vmatpush1.msra.mxu0 0.0
      %416 = vmatprep.subr.mxu0 0.0
      %417 = vmatpush1.msra.mxu0 0.0
      %418 = vmatprep.subr.mxu0 0.0
      %419 = vmatpush1.msra.mxu0 0.0
      %420 = vmatprep.subr.mxu0 0.0
      %421 = vmatpush1.msra.mxu0 0.0
      %422 = vmatprep.mubr.f32.mxu0 0.0
      %423 = vmatmul.mubr.f32.gmra.mrb[0].mxu0 %v311
      %v424 = vpop.f32.mrb[0].mxu0
      %v425 = vadd.f32 %v307, %v424
      %v426 = vpop.f32.mrb[0].mxu0
      %427 = vmatprep.mubr.f32.mxu0 0.0
      %428 = vmatmul.mubr.f32.gmra.mrb[0].mxu0 %v314
      %v429 = vpop.f32.mrb[0].mxu0
      %v430 = vadd.f32 %v307, %v429
      %v431 = vpop.f32.mrb[0].mxu0
      %432 = vmatprep.mubr.f32.mxu0 0.0
      %433 = vmatmul.mubr.f32.gmra.mrb[0].mxu0 %v317
      %v434 = vpop.f32.mrb[0].mxu0
      %v435 = vadd.f32 %v307, %v434
      %v436 = vpop.f32.mrb[0].mxu0
      %437 = vmatprep.mubr.f32.mxu0 0.0
      %438 = vmatmul.mubr.f32.gmra.mrb[0].mxu0 %v320
      %v439 = vpop.f32.mrb[0].mxu0
      %v440 = vadd.f32 %v307, %v439
      %v441 = vpop.f32.mrb[0].mxu0
      %442 = vmatprep.mubr.f32.mxu0 0.0
      %443 = vmatmul.mubr.f32.gmra.mrb[0].mxu0 %v323
      %v444 = vpop.f32.mrb[0].mxu0
      %v445 = vadd.f32 %v307, %v444
      %v446 = vpop.f32.mrb[0].mxu0
      %447 = vmatprep.mubr.f32.mxu0 0.0
      %448 = vmatmul.mubr.f32.gmra.mrb[0].mxu0 %v326
      %v449 = vpop.f32.mrb[0].mxu0
      %v450 = vadd.f32 %v307, %v449
      %v451 = vpop.f32.mrb[0].mxu0
      %452 = vmatprep.mubr.f32.mxu0 0.0
      %453 = vmatmul.mubr.f32.gmra.mrb[0].mxu0 %v329
      %v454 = vpop.f32.mrb[0].mxu0
      %v455 = vadd.f32 %v307, %v454
      %v456 = vpop.f32.mrb[0].mxu0
      %457 = vmatprep.mubr.f32.mxu0 0.0
      %458 = vmatmul.mubr.f32.gmra.mrb[0].mxu0 %v332
      %v459 = vpop.f32.mrb[0].mxu0
      %v460 = vadd.f32 %v307, %v459
      %v461 = vpop.f32.mrb[0].mxu0
      %462 = vmatprep.mubr.f32.mxu0 0.0
      %463 = vmatmul.mubr.f32.gmra.mrb[0].mxu0 %v335
      %v464 = vpop.f32.mrb[0].mxu0
      %v465 = vadd.f32 %v307, %v464
      %v466 = vpop.f32.mrb[0].mxu0
      %467 = vmatprep.mubr.f32.mxu0 0.0
      %468 = vmatmul.mubr.f32.gmra.mrb[0].mxu0 %v338
      %v469 = vpop.f32.mrb[0].mxu0
      %v470 = vadd.f32 %v307, %v469
      %v471 = vpop.f32.mrb[0].mxu0
      %472 = vmatprep.mubr.f32.mxu0 0.0
      %473 = vmatmul.mubr.f32.gmra.mrb[0].mxu0 %v341
      %v474 = vpop.f32.mrb[0].mxu0
      %v475 = vadd.f32 %v307, %v474
      %v476 = vpop.f32.mrb[0].mxu0
      %477 = vmatprep.mubr.f32.mxu0 0.0
      %478 = vmatmul.mubr.f32.gmra.mrb[0].mxu0 %v344
      %v479 = vpop.f32.mrb[0].mxu0
      %v480 = vadd.f32 %v307, %v479
      %v481 = vpop.f32.mrb[0].mxu0
      %482 = vmatprep.mubr.f32.mxu0 0.0
      %483 = vmatmul.mubr.f32.gmra.mrb[0].mxu0 %v347
      %v484 = vpop.f32.mrb[0].mxu0
      %v485 = vadd.f32 %v307, %v484
      %v486 = vpop.f32.mrb[0].mxu0
      %487 = vmatprep.mubr.f32.mxu0 0.0
      %488 = vmatmul.mubr.f32.gmra.mrb[0].mxu0 %v350
      %v489 = vpop.f32.mrb[0].mxu0
      %v490 = vadd.f32 %v307, %v489
      %v491 = vpop.f32.mrb[0].mxu0
      %492 = vmatprep.mubr.f32.mxu0 0.0
      %493 = vmatmul.mubr.f32.gmra.mrb[0].mxu0 %v353
      %v494 = vpop.f32.mrb[0].mxu0
      %v495 = vadd.f32 %v307, %v494
      %v496 = vpop.f32.mrb[0].mxu0
      %497 = vmatprep.mubr.f32.mxu0 0.0
      %498 = vmatmul.mubr.f32.gmra.mrb[0].mxu0 %v356
      %v499 = vpop.f32.mrb[0].mxu0
      %v500 = vadd.f32 %v307, %v499
      %v501 = vpop.f32.mrb[0].mxu0
      %502 = vdwg.mxu0
      %v503 = vmax.f32 %v425, 0.0
      %v504 = vmax.f32 %v430, 0.0
      %v505 = vmax.f32 %v435, 0.0
      %v506 = vmax.f32 %v440, 0.0
      %v507 = vmax.f32 %v445, 0.0
      %v508 = vmax.f32 %v450, 0.0
      %v509 = vmax.f32 %v455, 0.0
      %v510 = vmax.f32 %v460, 0.0
      %v511 = vmax.f32 %v465, 0.0
      %v512 = vmax.f32 %v470, 0.0
      %v513 = vmax.f32 %v475, 0.0
      %v514 = vmax.f32 %v480, 0.0
      %v515 = vmax.f32 %v485, 0.0
      %v516 = vmax.f32 %v490, 0.0
      %v517 = vmax.f32 %v495, 0.0
      %v518 = vmax.f32 %v500, 0.0
      %v519 = vld [vmem:[%s3] sm:$0xff]
      %v520 = vld [vmem:[%s3 + $0x8] sm:$0xff]
      %v521 = vld [vmem:[%s3 + $0x10] sm:$0xff]
      %v522 = vld [vmem:[%s3 + $0x18] sm:$0xff]
      %v523 = vld [vmem:[%s3 + $0x20] sm:$0xff]
      %v524 = vld [vmem:[%s3 + $0x28] sm:$0xff]
      %v525 = vld [vmem:[%s3 + $0x30] sm:$0xff]
      %v526 = vld [vmem:[%s3 + $0x38] sm:$0xff]
      %v527 = vld [vmem:[%s4] sm:$0x1]
      %v529 = vlaneseq
      %v530 = vshrl.u32 %v529, 7
      %v531 = vsub.s32 0, %v530
      %v532 = vrot.slane %v527, %v531
      %vm534 = vcmask 523264
      %v536 = vsel %vm534, %v503, 0
      %v539 = vsel %vm534, %v504, 0
      %v542 = vsel %vm534, %v505, 0
      %v545 = vsel %vm534, %v506, 0
      %v548 = vsel %vm534, %v507, 0
      %v551 = vsel %vm534, %v508, 0
      %v554 = vsel %vm534, %v509, 0
      %v557 = vsel %vm534, %v510, 0
      %v560 = vsel %vm534, %v511, 0
      %v563 = vsel %vm534, %v512, 0
      %v566 = vsel %vm534, %v513, 0
      %v569 = vsel %vm534, %v514, 0
      %v572 = vsel %vm534, %v515, 0
      %v575 = vsel %vm534, %v516, 0
      %v578 = vsel %vm534, %v517, 0
      %v581 = vsel %vm534, %v518, 0
      %583 = vmatprep.subr.mxu0 0.0
      %584 = vmatpush1.msra.mxu0 %v519
      %585 = vmatprep.subr.mxu0 0.0
      %586 = vmatpush1.msra.mxu0 %v520
      %587 = vmatprep.subr.mxu0 0.0
      %588 = vmatpush1.msra.mxu0 %v521
      %589 = vmatprep.subr.mxu0 0.0
      %590 = vmatpush1.msra.mxu0 %v522
      %591 = vmatprep.subr.mxu0 0.0
      %592 = vmatpush1.msra.mxu0 %v523
      %593 = vmatprep.subr.mxu0 0.0
      %594 = vmatpush1.msra.mxu0 %v524
      %595 = vmatprep.subr.mxu0 0.0
      %596 = vmatpush1.msra.mxu0 %v525
      %597 = vmatprep.subr.mxu0 0.0
      %598 = vmatpush1.msra.mxu0 %v526
      %599 = vmatprep.subr.mxu0 0.0
      %600 = vmatpush1.msra.mxu0 0.0
      %601 = vmatprep.subr.mxu0 0.0
      %602 = vmatpush1.msra.mxu0 0.0
      %603 = vmatprep.subr.mxu0 0.0
      %604 = vmatpush1.msra.mxu0 0.0
      %605 = vmatprep.subr.mxu0 0.0
      %606 = vmatpush1.msra.mxu0 0.0
      %607 = vmatprep.subr.mxu0 0.0
      %608 = vmatpush1.msra.mxu0 0.0
      %609 = vmatprep.subr.mxu0 0.0
      %610 = vmatpush1.msra.mxu0 0.0
      %611 = vmatprep.subr.mxu0 0.0
      %612 = vmatpush1.msra.mxu0 0.0
      %613 = vmatprep.subr.mxu0 0.0
      %614 = vmatpush1.msra.mxu0 0.0
      %615 = vmatprep.subr.mxu0 0.0
      %616 = vmatpush1.msra.mxu0 0.0
      %617 = vmatprep.subr.mxu0 0.0
      %618 = vmatpush1.msra.mxu0 0.0
      %619 = vmatprep.subr.mxu0 0.0
      %620 = vmatpush1.msra.mxu0 0.0
      %621 = vmatprep.subr.mxu0 0.0
      %622 = vmatpush1.msra.mxu0 0.0
      %623 = vmatprep.subr.mxu0 0.0
      %624 = vmatpush1.msra.mxu0 0.0
      %625 = vmatprep.subr.mxu0 0.0
      %626 = vmatpush1.msra.mxu0 0.0
      %627 = vmatprep.subr.mxu0 0.0
      %628 = vmatpush1.msra.mxu0 0.0
      %629 = vmatprep.subr.mxu0 0.0
      %630 = vmatpush1.msra.mxu0 0.0
      %631 = vmatprep.subr.mxu0 0.0
      %632 = vmatpush1.msra.mxu0 0.0
      %633 = vmatprep.subr.mxu0 0.0
      %634 = vmatpush1.msra.mxu0 0.0
      %635 = vmatprep.subr.mxu0 0.0
      %636 = vmatpush1.msra.mxu0 0.0
      %637 = vmatprep.subr.mxu0 0.0
      %638 = vmatpush1.msra.mxu0 0.0
      %639 = vmatprep.subr.mxu0 0.0
      %640 = vmatpush1.msra.mxu0 0.0
      %641 = vmatprep.subr.mxu0 0.0
      %642 = vmatpush1.msra.mxu0 0.0
      %643 = vmatprep.subr.mxu0 0.0
      %644 = vmatpush1.msra.mxu0 0.0
      %645 = vmatprep.subr.mxu0 0.0
      %646 = vmatpush1.msra.mxu0 0.0
      %647 = vmatprep.mubr.f32.mxu0 0.0
      %648 = vmatmul.mubr.f32.gmra.mrb[0].mxu0 %v536
      %v649 = vpop.f32.mrb[0].mxu0
      %v650 = vadd.f32 %v532, %v649
      %v651 = vpop.f32.mrb[0].mxu0
      %652 = vmatprep.mubr.f32.mxu0 0.0
      %653 = vmatmul.mubr.f32.gmra.mrb[0].mxu0 %v539
      %v654 = vpop.f32.mrb[0].mxu0
      %v655 = vadd.f32 %v532, %v654
      %v656 = vpop.f32.mrb[0].mxu0
      %657 = vmatprep.mubr.f32.mxu0 0.0
      %658 = vmatmul.mubr.f32.gmra.mrb[0].mxu0 %v542
      %v659 = vpop.f32.mrb[0].mxu0
      %v660 = vadd.f32 %v532, %v659
      %v661 = vpop.f32.mrb[0].mxu0
      %662 = vmatprep.mubr.f32.mxu0 0.0
      %663 = vmatmul.mubr.f32.gmra.mrb[0].mxu0 %v545
      %v664 = vpop.f32.mrb[0].mxu0
      %v665 = vadd.f32 %v532, %v664
      %v666 = vpop.f32.mrb[0].mxu0
      %667 = vmatprep.mubr.f32.mxu0 0.0
      %668 = vmatmul.mubr.f32.gmra.mrb[0].mxu0 %v548
      %v669 = vpop.f32.mrb[0].mxu0
      %v670 = vadd.f32 %v532, %v669
      %v671 = vpop.f32.mrb[0].mxu0
      %672 = vmatprep.mubr.f32.mxu0 0.0
      %673 = vmatmul.mubr.f32.gmra.mrb[0].mxu0 %v551
      %v674 = vpop.f32.mrb[0].mxu0
      %v675 = vadd.f32 %v532, %v674
      %v676 = vpop.f32.mrb[0].mxu0
      %677 = vmatprep.mubr.f32.mxu0 0.0
      %678 = vmatmul.mubr.f32.gmra.mrb[0].mxu0 %v554
      %v679 = vpop.f32.mrb[0].mxu0
      %v680 = vadd.f32 %v532, %v679
      %v681 = vpop.f32.mrb[0].mxu0
      %682 = vmatprep.mubr.f32.mxu0 0.0
      %683 = vmatmul.mubr.f32.gmra.mrb[0].mxu0 %v557
      %v684 = vpop.f32.mrb[0].mxu0
      %v685 = vadd.f32 %v532, %v684
      %v686 = vpop.f32.mrb[0].mxu0
      %687 = vmatprep.mubr.f32.mxu0 0.0
      %688 = vmatmul.mubr.f32.gmra.mrb[0].mxu0 %v560
      %v689 = vpop.f32.mrb[0].mxu0
      %v690 = vadd.f32 %v532, %v689
      %v691 = vpop.f32.mrb[0].mxu0
      %692 = vmatprep.mubr.f32.mxu0 0.0
      %693 = vmatmul.mubr.f32.gmra.mrb[0].mxu0 %v563
      %v694 = vpop.f32.mrb[0].mxu0
      %v695 = vadd.f32 %v532, %v694
      %v696 = vpop.f32.mrb[0].mxu0
      %697 = vmatprep.mubr.f32.mxu0 0.0
      %698 = vmatmul.mubr.f32.gmra.mrb[0].mxu0 %v566
      %v699 = vpop.f32.mrb[0].mxu0
      %v700 = vadd.f32 %v532, %v699
      %v701 = vpop.f32.mrb[0].mxu0
      %702 = vmatprep.mubr.f32.mxu0 0.0
      %703 = vmatmul.mubr.f32.gmra.mrb[0].mxu0 %v569
      %v704 = vpop.f32.mrb[0].mxu0
      %v705 = vadd.f32 %v532, %v704
      %v706 = vpop.f32.mrb[0].mxu0
      %707 = vmatprep.mubr.f32.mxu0 0.0
      %708 = vmatmul.mubr.f32.gmra.mrb[0].mxu0 %v572
      %v709 = vpop.f32.mrb[0].mxu0
      %v710 = vadd.f32 %v532, %v709
      %v711 = vpop.f32.mrb[0].mxu0
      %712 = vmatprep.mubr.f32.mxu0 0.0
      %713 = vmatmul.mubr.f32.gmra.mrb[0].mxu0 %v575
      %v714 = vpop.f32.mrb[0].mxu0
      %v715 = vadd.f32 %v532, %v714
      %v716 = vpop.f32.mrb[0].mxu0
      %717 = vmatprep.mubr.f32.mxu0 0.0
      %718 = vmatmul.mubr.f32.gmra.mrb[0].mxu0 %v578
      %v719 = vpop.f32.mrb[0].mxu0
      %v720 = vadd.f32 %v532, %v719
      %v721 = vpop.f32.mrb[0].mxu0
      %722 = vmatprep.mubr.f32.mxu0 0.0
      %723 = vmatmul.mubr.f32.gmra.mrb[0].mxu0 %v581
      %v724 = vpop.f32.mrb[0].mxu0
      %v725 = vadd.f32 %v532, %v724
      %v726 = vpop.f32.mrb[0].mxu0
      %727 = vdwg.mxu0
      %v728 = vmax.f32 %v650, 0.0
      %v729 = vmax.f32 %v655, 0.0
      %v730 = vmax.f32 %v660, 0.0
      %v731 = vmax.f32 %v665, 0.0
      %v732 = vmax.f32 %v670, 0.0
      %v733 = vmax.f32 %v675, 0.0
      %v734 = vmax.f32 %v680, 0.0
      %v735 = vmax.f32 %v685, 0.0
      %v736 = vmax.f32 %v690, 0.0
      %v737 = vmax.f32 %v695, 0.0
      %v738 = vmax.f32 %v700, 0.0
      %v739 = vmax.f32 %v705, 0.0
      %v740 = vmax.f32 %v710, 0.0
      %v741 = vmax.f32 %v715, 0.0
      %v742 = vmax.f32 %v720, 0.0
      %v743 = vmax.f32 %v725, 0.0
      %v744 = vld [vmem:[%s5] sm:$0xff]
      %v745 = vld [vmem:[%s5 + $0x8] sm:$0xff]
      %v746 = vld [vmem:[%s5 + $0x10] sm:$0xff]
      %v747 = vld [vmem:[%s5 + $0x18] sm:$0xff]
      %v748 = vld [vmem:[%s5 + $0x20] sm:$0xff]
      %v749 = vld [vmem:[%s5 + $0x28] sm:$0xff]
      %v750 = vld [vmem:[%s5 + $0x30] sm:$0xff]
      %v751 = vld [vmem:[%s5 + $0x38] sm:$0xff]
      %v752 = vld [vmem:[%s6] sm:$0x1]
      %v754 = vlaneseq
      %v755 = vshrl.u32 %v754, 7
      %v756 = vsub.s32 0, %v755
      %v757 = vrot.slane %v752, %v756
      %v760 = vsel %vm534, %v728, 0
      %v763 = vsel %vm534, %v729, 0
      %v766 = vsel %vm534, %v730, 0
      %v769 = vsel %vm534, %v731, 0
      %v772 = vsel %vm534, %v732, 0
      %v775 = vsel %vm534, %v733, 0
      %v778 = vsel %vm534, %v734, 0
      %v781 = vsel %vm534, %v735, 0
      %v784 = vsel %vm534, %v736, 0
      %v787 = vsel %vm534, %v737, 0
      %v790 = vsel %vm534, %v738, 0
      %v793 = vsel %vm534, %v739, 0
      %v796 = vsel %vm534, %v740, 0
      %v799 = vsel %vm534, %v741, 0
      %v802 = vsel %vm534, %v742, 0
      %v805 = vsel %vm534, %v743, 0
      %807 = vmatprep.subr.mxu0 0.0
      %808 = vmatpush1.msra.mxu0 %v744
      %809 = vmatprep.subr.mxu0 0.0
      %810 = vmatpush1.msra.mxu0 %v745
      %811 = vmatprep.subr.mxu0 0.0
      %812 = vmatpush1.msra.mxu0 %v746
      %813 = vmatprep.subr.mxu0 0.0
      %814 = vmatpush1.msra.mxu0 %v747
      %815 = vmatprep.subr.mxu0 0.0
      %816 = vmatpush1.msra.mxu0 %v748
      %817 = vmatprep.subr.mxu0 0.0
      %818 = vmatpush1.msra.mxu0 %v749
      %819 = vmatprep.subr.mxu0 0.0
      %820 = vmatpush1.msra.mxu0 %v750
      %821 = vmatprep.subr.mxu0 0.0
      %822 = vmatpush1.msra.mxu0 %v751
      %823 = vmatprep.subr.mxu0 0.0
      %824 = vmatpush1.msra.mxu0 0.0
      %825 = vmatprep.subr.mxu0 0.0
      %826 = vmatpush1.msra.mxu0 0.0
      %827 = vmatprep.subr.mxu0 0.0
      %828 = vmatpush1.msra.mxu0 0.0
      %829 = vmatprep.subr.mxu0 0.0
      %830 = vmatpush1.msra.mxu0 0.0
      %831 = vmatprep.subr.mxu0 0.0
      %832 = vmatpush1.msra.mxu0 0.0
      %833 = vmatprep.subr.mxu0 0.0
      %834 = vmatpush1.msra.mxu0 0.0
      %835 = vmatprep.subr.mxu0 0.0
      %836 = vmatpush1.msra.mxu0 0.0
      %837 = vmatprep.subr.mxu0 0.0
      %838 = vmatpush1.msra.mxu0 0.0
      %839 = vmatprep.subr.mxu0 0.0
      %840 = vmatpush1.msra.mxu0 0.0
      %841 = vmatprep.subr.mxu0 0.0
      %842 = vmatpush1.msra.mxu0 0.0
      %843 = vmatprep.subr.mxu0 0.0
      %844 = vmatpush1.msra.mxu0 0.0
      %845 = vmatprep.subr.mxu0 0.0
      %846 = vmatpush1.msra.mxu0 0.0
      %847 = vmatprep.subr.mxu0 0.0
      %848 = vmatpush1.msra.mxu0 0.0
      %849 = vmatprep.subr.mxu0 0.0
      %850 = vmatpush1.msra.mxu0 0.0
      %851 = vmatprep.subr.mxu0 0.0
      %852 = vmatpush1.msra.mxu0 0.0
      %853 = vmatprep.subr.mxu0 0.0
      %854 = vmatpush1.msra.mxu0 0.0
      %855 = vmatprep.subr.mxu0 0.0
      %856 = vmatpush1.msra.mxu0 0.0
      %857 = vmatprep.subr.mxu0 0.0
      %858 = vmatpush1.msra.mxu0 0.0
      %859 = vmatprep.subr.mxu0 0.0
      %860 = vmatpush1.msra.mxu0 0.0
      %861 = vmatprep.subr.mxu0 0.0
      %862 = vmatpush1.msra.mxu0 0.0
      %863 = vmatprep.subr.mxu0 0.0
      %864 = vmatpush1.msra.mxu0 0.0
      %865 = vmatprep.subr.mxu0 0.0
      %866 = vmatpush1.msra.mxu0 0.0
      %867 = vmatprep.subr.mxu0 0.0
      %868 = vmatpush1.msra.mxu0 0.0
      %869 = vmatprep.subr.mxu0 0.0
      %870 = vmatpush1.msra.mxu0 0.0
      %871 = vmatprep.mubr.f32.mxu0 0.0
      %872 = vmatmul.mubr.f32.gmra.mrb[0].mxu0 %v760
      %v873 = vpop.f32.mrb[0].mxu0
      %v874 = vadd.f32 %v757, %v873
      %v875 = vpop.f32.mrb[0].mxu0
      %876 = vmatprep.mubr.f32.mxu0 0.0
      %877 = vmatmul.mubr.f32.gmra.mrb[0].mxu0 %v763
      %v878 = vpop.f32.mrb[0].mxu0
      %v879 = vadd.f32 %v757, %v878
      %v880 = vpop.f32.mrb[0].mxu0
      %881 = vmatprep.mubr.f32.mxu0 0.0
      %882 = vmatmul.mubr.f32.gmra.mrb[0].mxu0 %v766
      %v883 = vpop.f32.mrb[0].mxu0
      %v884 = vadd.f32 %v757, %v883
      %v885 = vpop.f32.mrb[0].mxu0
      %886 = vmatprep.mubr.f32.mxu0 0.0
      %887 = vmatmul.mubr.f32.gmra.mrb[0].mxu0 %v769
      %v888 = vpop.f32.mrb[0].mxu0
      %v889 = vadd.f32 %v757, %v888
      %v890 = vpop.f32.mrb[0].mxu0
      %891 = vmatprep.mubr.f32.mxu0 0.0
      %892 = vmatmul.mubr.f32.gmra.mrb[0].mxu0 %v772
      %v893 = vpop.f32.mrb[0].mxu0
      %v894 = vadd.f32 %v757, %v893
      %v895 = vpop.f32.mrb[0].mxu0
      %896 = vmatprep.mubr.f32.mxu0 0.0
      %897 = vmatmul.mubr.f32.gmra.mrb[0].mxu0 %v775
      %v898 = vpop.f32.mrb[0].mxu0
      %v899 = vadd.f32 %v757, %v898
      %v900 = vpop.f32.mrb[0].mxu0
      %901 = vmatprep.mubr.f32.mxu0 0.0
      %902 = vmatmul.mubr.f32.gmra.mrb[0].mxu0 %v778
      %v903 = vpop.f32.mrb[0].mxu0
      %v904 = vadd.f32 %v757, %v903
      %v905 = vpop.f32.mrb[0].mxu0
      %906 = vmatprep.mubr.f32.mxu0 0.0
      %907 = vmatmul.mubr.f32.gmra.mrb[0].mxu0 %v781
      %v908 = vpop.f32.mrb[0].mxu0
      %v909 = vadd.f32 %v757, %v908
      %v910 = vpop.f32.mrb[0].mxu0
      %911 = vmatprep.mubr.f32.mxu0 0.0
      %912 = vmatmul.mubr.f32.gmra.mrb[0].mxu0 %v784
      %v913 = vpop.f32.mrb[0].mxu0
      %v914 = vadd.f32 %v757, %v913
      %v915 = vpop.f32.mrb[0].mxu0
      %916 = vmatprep.mubr.f32.mxu0 0.0
      %917 = vmatmul.mubr.f32.gmra.mrb[0].mxu0 %v787
      %v918 = vpop.f32.mrb[0].mxu0
      %v919 = vadd.f32 %v757, %v918
      %v920 = vpop.f32.mrb[0].mxu0
      %921 = vmatprep.mubr.f32.mxu0 0.0
      %922 = vmatmul.mubr.f32.gmra.mrb[0].mxu0 %v790
      %v923 = vpop.f32.mrb[0].mxu0
      %v924 = vadd.f32 %v757, %v923
      %v925 = vpop.f32.mrb[0].mxu0
      %926 = vmatprep.mubr.f32.mxu0 0.0
      %927 = vmatmul.mubr.f32.gmra.mrb[0].mxu0 %v793
      %v928 = vpop.f32.mrb[0].mxu0
      %v929 = vadd.f32 %v757, %v928
      %v930 = vpop.f32.mrb[0].mxu0
      %931 = vmatprep.mubr.f32.mxu0 0.0
      %932 = vmatmul.mubr.f32.gmra.mrb[0].mxu0 %v796
      %v933 = vpop.f32.mrb[0].mxu0
      %v934 = vadd.f32 %v757, %v933
      %v935 = vpop.f32.mrb[0].mxu0
      %936 = vmatprep.mubr.f32.mxu0 0.0
      %937 = vmatmul.mubr.f32.gmra.mrb[0].mxu0 %v799
      %v938 = vpop.f32.mrb[0].mxu0
      %v939 = vadd.f32 %v757, %v938
      %v940 = vpop.f32.mrb[0].mxu0
      %941 = vmatprep.mubr.f32.mxu0 0.0
      %942 = vmatmul.mubr.f32.gmra.mrb[0].mxu0 %v802
      %v943 = vpop.f32.mrb[0].mxu0
      %v944 = vadd.f32 %v757, %v943
      %v945 = vpop.f32.mrb[0].mxu0
      %946 = vmatprep.mubr.f32.mxu0 0.0
      %947 = vmatmul.mubr.f32.gmra.mrb[0].mxu0 %v805
      %v948 = vpop.f32.mrb[0].mxu0
      %v949 = vadd.f32 %v757, %v948
      %v950 = vpop.f32.mrb[0].mxu0
      %951 = vdwg.mxu0
      %vm952 = vcmask 130048
      %953 = vst.msk [vmem:[%s280] sm:$0xff] %vm952, %v874
      %954 = vst.msk [vmem:[%s280 + $0x8] sm:$0xff] %vm952, %v879
      %955 = vst.msk [vmem:[%s280 + $0x10] sm:$0xff] %vm952, %v884
      %956 = vst.msk [vmem:[%s280 + $0x18] sm:$0xff] %vm952, %v889
      %957 = vst.msk [vmem:[%s280 + $0x20] sm:$0xff] %vm952, %v894
      %958 = vst.msk [vmem:[%s280 + $0x28] sm:$0xff] %vm952, %v899
      %959 = vst.msk [vmem:[%s280 + $0x30] sm:$0xff] %vm952, %v904
      %960 = vst.msk [vmem:[%s280 + $0x38] sm:$0xff] %vm952, %v909
      %961 = vst.msk [vmem:[%s280 + $0x40] sm:$0xff] %vm952, %v914
      %962 = vst.msk [vmem:[%s280 + $0x48] sm:$0xff] %vm952, %v919
      %963 = vst.msk [vmem:[%s280 + $0x50] sm:$0xff] %vm952, %v924
      %964 = vst.msk [vmem:[%s280 + $0x58] sm:$0xff] %vm952, %v929
      %965 = vst.msk [vmem:[%s280 + $0x60] sm:$0xff] %vm952, %v934
      %966 = vst.msk [vmem:[%s280 + $0x68] sm:$0xff] %vm952, %v939
      %967 = vst.msk [vmem:[%s280 + $0x70] sm:$0xff] %vm952, %v944
      %968 = vst.msk [vmem:[%s280 + $0x78] sm:$0xff] %vm952, %v949
      %s969 = smul.u32 16, %s18
      %p970 = scmp.lt.s32.totalorder %s969, 31
      %s971 = scalar_select %p970, %s969, 31
      %s972 = smul.addr %s971, 8
      %s973 = scalar_lea.vmem %s7, %s972
      // Predicated region
      $region49: #{tpu_custom_call.1} parent=47 // pred_check
        %p974 = pneg %p188
      $region50: #{tpu_custom_call.1} parent=47 // pred_check_branch
        %976 = sbr.rel (%p974) target = $region52
      $region51: #{tpu_custom_call.1} parent=47 // pred_region
        %s977 = smul.u32 16, %s18
      $region52: #{tpu_custom_call.1} parent=47 // pred_fallthru
        _
    $region48: #{tpu_custom_call.1} parent=5 // pred_fallthru
      _
    %p978 = scmp.le.s32.totalorder 2, %s13
    // Predicated region
    $region53: #{tpu_custom_call.1} parent=5 // pred_check
      %p979 = pneg %p978
    $region54: #{tpu_custom_call.1} parent=5 // pred_check_branch
      %981 = sbr.rel (%p979) target = $region56
    $region55: #{tpu_custom_call.1} parent=5 // pred_region
      %s982 = ssub.s32 %s13, 2
      // Predicated region
      $region57: #{tpu_custom_call.1} parent=55 // pred_check
        %p983 = pneg %p194
      $region58: #{tpu_custom_call.1} parent=55 // pred_check_branch
        %985 = sbr.rel (%p983) target = $region60
      $region59: #{tpu_custom_call.1} parent=55 // pred_region
        %s986 = smul.u32 16, %s19
        %p987 = scmp.lt.s32.totalorder %s986, 31
        %s988 = scalar_select %p987, %s986, 31
        %s989 = smul.addr %s988, 8
        %s990 = scalar_lea.vmem %s7, %s989
      $region60: #{tpu_custom_call.1} parent=55 // pred_fallthru
        _
    $region56: #{tpu_custom_call.1} parent=5 // pred_fallthru
      _
  $region6: #{tpu_custom_call.1} parent=0 // loop_footer
    %s17 = sadd.s32 1, %s13
  $region7: #{tpu_custom_call.1} parent=0 // loop_footer_branch
    %12 = sbr.rel target = $region3
  $region8: #{tpu_custom_call.1} parent=0 // loop_exit
    _

</llo_original>
